<compile_context>
chip_gen: v5e
topology: v5e:2x2
jax: 0.10.0
libtpu: 0.0.40
codegen_flags: <defaults>
</compile_context>

<pallas_src>
import jax
import jax.numpy as jnp
from jax.experimental import pallas as pl
from jax.experimental.pallas import tpu as pltpu


def _round_up(a, b):
    return (a + b - 1) // b * b


def _pick_vmem_limit():
    """Per-generation scoped-VMEM limit, leaving headroom below physical VMEM."""
    phys = 128 * 1024 * 1024                      # v5e / v6e default assumption
    try:
        info = pltpu.get_tpu_info()
        cap = getattr(info, "vmem_capacity_bytes", None)
        if cap:
            phys = int(cap)
    except Exception:
        pass
    if phys <= 64 * 1024 * 1024:
        # v7x: 64 MiB physical per TC -> leave ~16 MiB headroom.
        return 48 * 1024 * 1024
    # v5e / v6e: 128 MiB physical -> use most of it but keep headroom.
    return min(phys - 16 * 1024 * 1024, 112 * 1024 * 1024)


def _se_kernel(x_ref, w1t_ref, b1_ref, w2t_ref, b2_ref, o_ref, acc_ref):
    # x_ref block: (TN, C, HW_TILE).  acc_ref: (TN, C, 128) f32 per-lane sums.
    hw_step = pl.program_id(1)

    @pl.when(hw_step == 0)
    def _():
        acc_ref[...] = jnp.zeros_like(acc_ref)

    hw_tile = x_ref.shape[-1]
    n_chunks = hw_tile // 128

    # Deferred cross-lane reduction: accumulate per-lane partial sums with
    # vreg-aligned VPU adds only.  The 128-aligned static lane slices select
    # whole vregs (no relayout), and the per-chunk astype streams the f32
    # upconvert instead of materializing a full f32 copy of the block.
    acc = acc_ref[...]
    for i in range(n_chunks):
        acc = acc + x_ref[:, :, i * 128:(i + 1) * 128].astype(jnp.float32)
    acc_ref[...] = acc

    @pl.when(hw_step == pl.num_programs(1) - 1)
    def _():
        # One XLU lane-reduce per batch tile (instead of one per spatial step).
        pooled = jnp.sum(acc_ref[...], axis=-1)                        # (TN, C)
        # fc1 (1x1 conv == dense): (TN, C) @ (C, C_r) + b1, then ReLU.
        # The 1/(H*W) mean scale is folded into w1t in the wrapper.
        h = jnp.dot(pooled, w1t_ref[...],
                    preferred_element_type=jnp.float32) + b1_ref[...]  # (TN, C_r)
        h = jnp.maximum(h, 0.0)
        # fc2: (TN, C_r) @ (C_r, C) + b2, then Sigmoid.
        y = jnp.dot(h, w2t_ref[...],
                    preferred_element_type=jnp.float32) + b2_ref[...]  # (TN, C)
        o_ref[...] = jax.nn.sigmoid(y).astype(o_ref.dtype)


def se_weight_module(x, w1, b1, w2, b2, *, tn=None, hw_tile=None,
                     vmem_limit_bytes=None):
    """x: (N, C, H, W).  w1: (C_r, C), b1: (C_r,), w2: (C, C_r), b2: (C,).
    Returns (N, C, 1, 1) sigmoid channel weights, matching SEWeightModule.forward."""
    N, C, H, W = x.shape
    C_r = w1.shape[0]
    HW = H * W
    itemsize = jnp.dtype(x.dtype).itemsize

    if vmem_limit_bytes is None:
        vmem_limit_bytes = _pick_vmem_limit()

    # --- tile selection -----------------------------------------------------
    tn_user = tn is not None
    if tn is None:
        tn = min(_round_up(N, 8), 128)           # sublane-aligned batch tile
    else:
        tn = _round_up(tn, 8)
    if hw_tile is None:
        hw_tile = min(_round_up(HW, 128), 4096)  # lane-dense spatial tile
    else:
        hw_tile = _round_up(hw_tile, 128)

    # v7x megacore: keep the "parallel" batch axis non-degenerate when possible
    # (2 TensorCores). Harmless on single-TC v5e/v6e.
    if (not tn_user) and N >= 16 and _round_up(N, tn) // tn < 2:
        tn = max(8, _round_up((N + 1) // 2, 8))

    # --- VMEM budget: account for ALL resident buffers ----------------------
    def _footprint(tn_, hw_, n_buf):
        x_b = n_buf * tn_ * C * hw_ * itemsize                 # x pipeline bufs
        w_b = 2 * (C * C_r + C_r * C + C_r + C) * 4            # dbl-buf weights/bias
        o_b = 2 * tn_ * C * itemsize                           # dbl-buf output
        a_b = tn_ * C * 128 * 4                                 # acc scratch
        return x_b + w_b + o_b + a_b

    budget = vmem_limit_bytes - 4 * 1024 * 1024                 # internal scratch
    # Prefer shrinking tn (down to 8) before hw_tile: step count depends only on
    # the product, but hw_tile sets the contiguous DMA run length per (n, c) row.
    while _footprint(tn, hw_tile, 2) >= budget and tn > 8:
        tn = max(8, tn // 2)
    while _footprint(tn, hw_tile, 2) >= budget and hw_tile > 128:
        hw_tile = max(128, _round_up(hw_tile // 2, 128))

    # Very short strided DMA runs (hw_tile == 128): add a third pipeline buffer
    # to hide descriptor/latency overhead, if the budget allows.
    n_buf = 2
    if hw_tile == 128 and _footprint(tn, hw_tile, 3) < budget:
        n_buf = 3

    N_pad = _round_up(N, tn)
    HW_pad = _round_up(HW, hw_tile)

    # --- data prep ----------------------------------------------------------
    x_flat = x.reshape(N, C, HW)
    if N_pad != N or HW_pad != HW:
        # Zero padding: does not perturb the spatial sum; extra batch rows are
        # sliced off after the kernel.
        x_flat = jnp.pad(x_flat, ((0, N_pad - N), (0, 0), (0, HW_pad - HW)))

    # Pre-transpose the 1x1-conv weights so the kernel does row-major matmuls
    # with the lane (last) dim dense, and fold the mean's 1/(H*W) into w1t.
    w1t = (w1.T / jnp.float32(HW)).astype(jnp.float32)   # (C, C_r)
    w2t = w2.T.astype(jnp.float32)                       # (C_r, C)
    b1_2d = b1.reshape(1, C_r).astype(jnp.float32)
    b2_2d = b2.reshape(1, C).astype(jnp.float32)

    grid = (N_pad // tn, HW_pad // hw_tile)

    if n_buf == 2:
        x_spec = pl.BlockSpec((tn, C, hw_tile), lambda n, s: (n, 0, s))
    else:
        x_spec = pl.BlockSpec((tn, C, hw_tile), lambda n, s: (n, 0, s),
                              pipeline_mode=pl.Buffered(n_buf))

    out = pl.pallas_call(
        _se_kernel,
        out_shape=jax.ShapeDtypeStruct((N_pad, C), x.dtype),
        grid_spec=pltpu.PrefetchScalarGridSpec(
            num_scalar_prefetch=0,
            grid=grid,
            in_specs=[
                x_spec,
                pl.BlockSpec((C, C_r), lambda n, s: (0, 0)),
                pl.BlockSpec((1, C_r), lambda n, s: (0, 0)),
                pl.BlockSpec((C_r, C), lambda n, s: (0, 0)),
                pl.BlockSpec((1, C),   lambda n, s: (0, 0)),
            ],
            out_specs=pl.BlockSpec((tn, C), lambda n, s: (n, 0)),
            scratch_shapes=[pltpu.VMEM((tn, C, 128), jnp.float32)],
        ),
        compiler_params=pltpu.CompilerParams(
            dimension_semantics=("parallel", "arbitrary"),
            vmem_limit_bytes=vmem_limit_bytes),
    )(x_flat, w1t, b1_2d, w2t, b2_2d)

    return out[:N].reshape(N, C, 1, 1)


def _reference(x, w1, b1, w2, b2):
    # Pure-JAX reference mirroring the PyTorch module.
    pooled = jnp.mean(x, axis=(2, 3))                       # (N, C)
    h = jnp.maximum(pooled @ w1.T + b1, 0.0)                # (N, C_r)
    y = jax.nn.sigmoid(h @ w2.T + b2)                       # (N, C)
    return y[:, :, None, None]


def _make_params(key, C, C_r):
    k1, k2, k3, k4 = jax.random.split(key, 4)
    w1 = jax.random.normal(k1, (C_r, C), dtype=jnp.float32) * (1.0 / jnp.sqrt(C))
    b1 = jax.random.normal(k2, (C_r,),   dtype=jnp.float32) * 0.1
    w2 = jax.random.normal(k3, (C, C_r), dtype=jnp.float32) * (1.0 / jnp.sqrt(C_r))
    b2 = jax.random.normal(k4, (C,),     dtype=jnp.float32) * 0.1
    return w1, b1, w2, b2


if __name__ == "__main__":
    key = jax.random.PRNGKey(0)

    # ---- case 1: shapes matching the original module defaults --------------
    N, C, H, W = 2, 32, 16, 16
    reduction = 16
    C_r = C // reduction                                    # = 2
    kx, kp = jax.random.split(key)
    x = jax.random.normal(kx, (N, C, H, W), dtype=jnp.float32)
    w1, b1, w2, b2 = _make_params(kp, C, C_r)

    out = jax.block_until_ready(se_weight_module(x, w1, b1, w2, b2))
    ref = _reference(x, w1, b1, w2, b2)
    assert out.shape == (N, C, 1, 1), out.shape
    assert jnp.allclose(out, ref, atol=1e-5, rtol=1e-5), "mismatch vs reference (case 1)"

    # ---- case 2: exercises batch padding + multi-step spatial reduction ----
    N2, C2, H2, W2 = 3, 64, 32, 32
    C2_r = C2 // reduction                                  # = 4
    kx2, kp2 = jax.random.split(kp)
    x2 = jax.random.normal(kx2, (N2, C2, H2, W2), dtype=jnp.float32)
    w1b, b1b, w2b, b2b = _make_params(kp2, C2, C2_r)

    # Force hw_tile < H*W so the deferred-accumulator / pl.when path is hit.
    out2 = jax.block_until_ready(
        se_weight_module(x2, w1b, b1b, w2b, b2b, hw_tile=256))
    ref2 = _reference(x2, w1b, b1b, w2b, b2b)
    assert out2.shape == (N2, C2, 1, 1), out2.shape
    assert jnp.allclose(out2, ref2, atol=1e-5, rtol=1e-5), "mismatch vs reference (case 2)"

    print("KERNEL_OK")
</pallas_src>

<mosaic_0001>
module attributes {stable_mosaic.version = 11 : i64} {
  func.func @_se_kernel(%arg0: i32, %arg1: i32, %arg2: memref<8x32x256xf32, #tpu.memory_space<vmem>>, %arg3: memref<32x2xf32, #tpu.memory_space<vmem>>, %arg4: memref<1x2xf32, #tpu.memory_space<vmem>>, %arg5: memref<2x32xf32, #tpu.memory_space<vmem>>, %arg6: memref<1x32xf32, #tpu.memory_space<vmem>>, %arg7: memref<8x32xf32, #tpu.memory_space<vmem>>, %arg8: memref<8x32x128xf32, #tpu.memory_space<vmem>>) attributes {dimension_semantics = [#tpu.dimension_semantics<parallel>, #tpu.dimension_semantics<arbitrary>], iteration_bounds = array<i64: 1, 1>, scalar_prefetch = 0 : i64, scratch_operands = 1 : i64, tpu.core_type = #tpu.core_type<tc>, window_params = [{transform_indices = @transform_0, window_bounds = array<i64: 8, 32, 256>}, {pipeline_mode = #tpu.pipeline_mode<synchronous>, transform_indices = @transform_1, window_bounds = array<i64: 32, 2>}, {pipeline_mode = #tpu.pipeline_mode<synchronous>, transform_indices = @transform_2, window_bounds = array<i64: 1, 2>}, {pipeline_mode = #tpu.pipeline_mode<synchronous>, transform_indices = @transform_3, window_bounds = array<i64: 2, 32>}, {pipeline_mode = #tpu.pipeline_mode<synchronous>, transform_indices = @transform_4, window_bounds = array<i64: 1, 32>}, {transform_indices = @transform_5, window_bounds = array<i64: 8, 32>}]} {
    %c0_i32 = arith.constant 0 : i32
    %0 = arith.cmpi eq, %arg1, %c0_i32 : i32
    %1 = arith.extui %0 : i1 to i32
    %c0_i32_0 = arith.constant 0 : i32
    %2 = arith.cmpi ne, %1, %c0_i32_0 : i32
    scf.if %2 {
      %cst = arith.constant 0.000000e+00 : f32
      %12 = vector.broadcast %cst : f32 to vector<8x32x128xf32>
      %c0_13 = arith.constant 0 : index
      %c0_14 = arith.constant 0 : index
      %c0_15 = arith.constant 0 : index
      %13 = vector.load %arg8[%c0_13, %c0_14, %c0_15] : memref<8x32x128xf32, #tpu.memory_space<vmem>>, vector<8x32x128xf32>
      tpu.vector_store %arg8[%c0_13, %c0_14, %c0_15], %12 {strides = array<i32>} : memref<8x32x128xf32, #tpu.memory_space<vmem>>, vector<8x32x128xf32>,
    } else {
    }
    %c0 = arith.constant 0 : index
    %c0_1 = arith.constant 0 : index
    %c0_2 = arith.constant 0 : index
    %3 = vector.load %arg8[%c0, %c0_1, %c0_2] : memref<8x32x128xf32, #tpu.memory_space<vmem>>, vector<8x32x128xf32>
    %c0_3 = arith.constant 0 : index
    %c0_4 = arith.constant 0 : index
    %c0_5 = arith.constant 0 : index
    %4 = vector.load %arg2[%c0_3, %c0_4, %c0_5] : memref<8x32x256xf32, #tpu.memory_space<vmem>>, vector<8x32x128xf32>
    %5 = arith.addf %3, %4 : vector<8x32x128xf32>
    %c0_6 = arith.constant 0 : index
    %c0_7 = arith.constant 0 : index
    %c128 = arith.constant 128 : index
    %6 = vector.load %arg2[%c0_6, %c0_7, %c128] : memref<8x32x256xf32, #tpu.memory_space<vmem>>, vector<8x32x128xf32>
    %7 = arith.addf %5, %6 : vector<8x32x128xf32>
    %c0_8 = arith.constant 0 : index
    %c0_9 = arith.constant 0 : index
    %c0_10 = arith.constant 0 : index
    %8 = vector.load %arg8[%c0_8, %c0_9, %c0_10] : memref<8x32x128xf32, #tpu.memory_space<vmem>>, vector<8x32x128xf32>
    tpu.vector_store %arg8[%c0_8, %c0_9, %c0_10], %7 {strides = array<i32>} : memref<8x32x128xf32, #tpu.memory_space<vmem>>, vector<8x32x128xf32>,
    %c0_i32_11 = arith.constant 0 : i32
    %9 = arith.cmpi eq, %arg1, %c0_i32_11 : i32
    %10 = arith.extui %9 : i1 to i32
    %c0_i32_12 = arith.constant 0 : i32
    %11 = arith.cmpi ne, %10, %c0_i32_12 : i32
    scf.if %11 {
      %c0_13 = arith.constant 0 : index
      %c0_14 = arith.constant 0 : index
      %c0_15 = arith.constant 0 : index
      %12 = vector.load %arg8[%c0_13, %c0_14, %c0_15] : memref<8x32x128xf32, #tpu.memory_space<vmem>>, vector<8x32x128xf32>
      %cst = arith.constant dense<0.000000e+00> : vector<8x32xf32>
      %13 = vector.multi_reduction <add>, %12, %cst [2] : vector<8x32x128xf32> to vector<8x32xf32>
      %c0_16 = arith.constant 0 : index
      %c0_17 = arith.constant 0 : index
      %14 = vector.load %arg3[%c0_16, %c0_17] : memref<32x2xf32, #tpu.memory_space<vmem>>, vector<32x2xf32>
      %cst_18 = arith.constant dense<0.000000e+00> : vector<8x2xf32>
      %15 = tpu.matmul %13, %14, %cst_18 {dimension_numbers = #tpu.dot_dimension_numbers<[1], [0], [0], [1], [0, 0, 1, 1], [], []>} : vector<8x32xf32>, vector<32x2xf32>, vector<8x2xf32> -> vector<8x2xf32>
      %c0_19 = arith.constant 0 : index
      %c0_20 = arith.constant 0 : index
      %16 = vector.load %arg4[%c0_19, %c0_20] : memref<1x2xf32, #tpu.memory_space<vmem>>, vector<1x2xf32>
      %17 = vector.broadcast %16 : vector<1x2xf32> to vector<8x2xf32>
      %18 = arith.addf %15, %17 : vector<8x2xf32>
      %cst_21 = arith.constant 0.000000e+00 : f32
      %19 = vector.broadcast %cst_21 : f32 to vector<8x2xf32>
      %20 = arith.maximumf %18, %19 : vector<8x2xf32>
      %c0_22 = arith.constant 0 : index
      %c0_23 = arith.constant 0 : index
      %21 = vector.load %arg5[%c0_22, %c0_23] : memref<2x32xf32, #tpu.memory_space<vmem>>, vector<2x32xf32>
      %cst_24 = arith.constant dense<0.000000e+00> : vector<8x32xf32>
      %22 = tpu.matmul %20, %21, %cst_24 {dimension_numbers = #tpu.dot_dimension_numbers<[1], [0], [0], [1], [0, 0, 1, 1], [], []>} : vector<8x2xf32>, vector<2x32xf32>, vector<8x32xf32> -> vector<8x32xf32>
      %c0_25 = arith.constant 0 : index
      %c0_26 = arith.constant 0 : index
      %23 = vector.load %arg6[%c0_25, %c0_26] : memref<1x32xf32, #tpu.memory_space<vmem>>, vector<1x32xf32>
      %24 = vector.broadcast %23 : vector<1x32xf32> to vector<8x32xf32>
      %25 = arith.addf %22, %24 : vector<8x32xf32>
      %26 = arith.negf %25 : vector<8x32xf32>
      %27 = math.exp %26 : vector<8x32xf32>
      %cst_27 = arith.constant 1.000000e+00 : f32
      %28 = vector.broadcast %cst_27 : f32 to vector<8x32xf32>
      %29 = arith.addf %28, %27 : vector<8x32xf32>
      %30 = arith.divf %28, %29 : vector<8x32xf32>
      %c0_28 = arith.constant 0 : index
      %c0_29 = arith.constant 0 : index
      %31 = vector.load %arg7[%c0_28, %c0_29] : memref<8x32xf32, #tpu.memory_space<vmem>>, vector<8x32xf32>
      tpu.vector_store %arg7[%c0_28, %c0_29], %30 {strides = array<i32>} : memref<8x32xf32, #tpu.memory_space<vmem>>, vector<8x32xf32>,
    } else {
    }
    return
  }
  func.func @transform_0(%arg0: i32, %arg1: i32) -> (i32, i32, i32) {
    %c0_i32 = arith.constant 0 : i32
    %c0_i32_0 = arith.constant 0 : i32
    return %arg0, %c0_i32, %arg1 : i32, i32, i32
  }
  func.func @transform_1(%arg0: i32, %arg1: i32) -> (i32, i32) {
    %c0_i32 = arith.constant 0 : i32
    %c0_i32_0 = arith.constant 0 : i32
    %c0_i32_1 = arith.constant 0 : i32
    return %c0_i32, %c0_i32_0 : i32, i32
  }
  func.func @transform_2(%arg0: i32, %arg1: i32) -> (i32, i32) {
    %c0_i32 = arith.constant 0 : i32
    %c0_i32_0 = arith.constant 0 : i32
    %c0_i32_1 = arith.constant 0 : i32
    return %c0_i32, %c0_i32_0 : i32, i32
  }
  func.func @transform_3(%arg0: i32, %arg1: i32) -> (i32, i32) {
    %c0_i32 = arith.constant 0 : i32
    %c0_i32_0 = arith.constant 0 : i32
    %c0_i32_1 = arith.constant 0 : i32
    return %c0_i32, %c0_i32_0 : i32, i32
  }
  func.func @transform_4(%arg0: i32, %arg1: i32) -> (i32, i32) {
    %c0_i32 = arith.constant 0 : i32
    %c0_i32_0 = arith.constant 0 : i32
    %c0_i32_1 = arith.constant 0 : i32
    return %c0_i32, %c0_i32_0 : i32, i32
  }
  func.func @transform_5(%arg0: i32, %arg1: i32) -> (i32, i32) {
    %c0_i32 = arith.constant 0 : i32
    %c0_i32_0 = arith.constant 0 : i32
    return %arg0, %c0_i32 : i32, i32
  }
}

</mosaic_0001>

<llo_original>
// kernel: tpu_custom_call.1
$region0: #{tpu_custom_call.1}
  #allocation0 [shape = 'u32[]', space=smem, size = 0x4, offset = 0x4, fixed_abs, tag = 'smem constant byte address 0x4 - core index']
  #allocation1 [shape = 'u32[72,128]{1,0:T(1,128)}', space=vmem, size = 0x9000, scoped, tag = 'internal scratch']
  #allocation2 [shape = 'f32[8,32,128]{2,1,0:T(8,128)}', space=vmem, size = 0x20000, scoped, tag = 'scratch operand']
  %s0 = inlined_call_operand.hbm [shape: f32[8,32,256], index: 0, kind: input, shape index: {}]
  %s1 = inlined_call_operand.vmem [shape: f32[32,2], index: 1, kind: input, shape index: {}]
  %s2 = inlined_call_operand.vmem [shape: f32[1,2], index: 2, kind: input, shape index: {}]
  %s3 = inlined_call_operand.vmem [shape: f32[2,32], index: 3, kind: input, shape index: {}]
  %s4 = inlined_call_operand.vmem [shape: f32[1,32], index: 4, kind: input, shape index: {}]
  %s5 = inlined_call_operand.hbm [shape: f32[8,32], index: 5, kind: output, shape index: {}]
  %s6 = sld [smem:[#allocation0]]
  $region42: #{tpu_custom_call.1} parent=0
    _
  %s8 = ssub.s32 1, %s6
  %s9 = scalar_select 0, %s8, %s6
  $region1: #{tpu_custom_call.1} parent=0
    #allocation3 [shape = 'u8[262144]{0}', space=vmem, size = 0x40000, scoped, tag = 'input window, operand 0, single buffered']
    #allocation4 [shape = 's32[1]{0}', space=sflag, size = 0x4, scoped, tag = 'scoped memory for tpu_custom_call.1']
    #allocation5 [shape = 's32[1]{0}', space=sflag, size = 0x4, scoped, tag = 'scoped memory for tpu_custom_call.1']
    #allocation6 [shape = 'u8[4096]{0}', space=vmem, size = 0x1000, scoped, tag = 'output window, operand 0, single buffered']
    %10 = vsyncpa [#allocation4], 0
    %11 = vsyncpa [#allocation5], 0
    // Predicated region
    $region2: #{tpu_custom_call.1} parent=1 // pred_check
      _
    $region3: #{tpu_custom_call.1} parent=1 // pred_check_branch
      %13 = sbr.rel (0) target = $region5
    $region4: #{tpu_custom_call.1} parent=1 // pred_region
      %15 = vsyncadd [#allocation4], 0
      %s16 = sshll.u32 %s0, 4
      %s17 = int_to_ptr.hbm [resolvable:$true] %s16
      %s18 = sshll.u32 [#allocation3], 4
      %s19 = int_to_ptr.vmem [resolvable:$true] %s18
      %24 = dma.hbm_to_vmem [thread:$0]  %s17, 8192, %s19, [#allocation4], 256, 256, 16
    $region5: #{tpu_custom_call.1} parent=1 // pred_fallthru
      _
    // Predicated region
    $region6: #{tpu_custom_call.1} parent=1 // pred_check
      _
    $region7: #{tpu_custom_call.1} parent=1 // pred_check_branch
      %26 = sbr.rel (0) target = $region9
    $region8: #{tpu_custom_call.1} parent=1 // pred_region
      _
    $region9: #{tpu_custom_call.1} parent=1 // pred_fallthru
      _
    // Predicated region
    $region10: #{tpu_custom_call.1} parent=1 // pred_check
      _
    $region11: #{tpu_custom_call.1} parent=1 // pred_check_branch
      %28 = sbr.rel (0) target = $region13
    $region12: #{tpu_custom_call.1} parent=1 // pred_region
      _
    $region13: #{tpu_custom_call.1} parent=1 // pred_fallthru
      _
    // Predicated region
    $region14: #{tpu_custom_call.1} parent=1 // pred_check
      _
    $region15: #{tpu_custom_call.1} parent=1 // pred_check_branch
      %30 = sbr.rel (0) target = $region17
    $region16: #{tpu_custom_call.1} parent=1 // pred_region
      _
    $region17: #{tpu_custom_call.1} parent=1 // pred_fallthru
      _
    // Predicated region
    $region18: #{tpu_custom_call.1} parent=1 // pred_check
      _
    $region19: #{tpu_custom_call.1} parent=1 // pred_check_branch
      %32 = sbr.rel (0) target = $region21
    $region20: #{tpu_custom_call.1} parent=1 // pred_region
      _
    $region21: #{tpu_custom_call.1} parent=1 // pred_fallthru
      _
    // Predicated region
    $region22: #{tpu_custom_call.1} parent=1 // pred_check
      _
    $region23: #{tpu_custom_call.1} parent=1 // pred_check_branch
      %34 = sbr.rel (0) target = $region25
    $region24: #{tpu_custom_call.1} parent=1 // pred_region
      %36 = dma.done [#allocation4], 8192
    $region25: #{tpu_custom_call.1} parent=1 // pred_fallthru
      _
    %p37 = scmp.eq.s32.totalorder 0, 0
    // Predicated region
    $region26: #{tpu_custom_call.1} parent=1 // pred_check
      %p38 = pneg %p37
    $region27: #{tpu_custom_call.1} parent=1 // pred_check_branch
      %40 = sbr.rel (%p38) target = $region29
    $region28: #{tpu_custom_call.1} parent=1 // pred_region
      %41 = vst [vmem:[#allocation2] sm:$0xff] 0.0
      %42 = vst [vmem:[#allocation2 + $0x8] sm:$0xff] 0.0
      %43 = vst [vmem:[#allocation2 + $0x10] sm:$0xff] 0.0
      %44 = vst [vmem:[#allocation2 + $0x18] sm:$0xff] 0.0
      %45 = vst [vmem:[#allocation2 + $0x20] sm:$0xff] 0.0
      %46 = vst [vmem:[#allocation2 + $0x28] sm:$0xff] 0.0
      %47 = vst [vmem:[#allocation2 + $0x30] sm:$0xff] 0.0
      %48 = vst [vmem:[#allocation2 + $0x38] sm:$0xff] 0.0
      %49 = vst [vmem:[#allocation2 + $0x40] sm:$0xff] 0.0
      %50 = vst [vmem:[#allocation2 + $0x48] sm:$0xff] 0.0
      %51 = vst [vmem:[#allocation2 + $0x50] sm:$0xff] 0.0
      %52 = vst [vmem:[#allocation2 + $0x58] sm:$0xff] 0.0
      %53 = vst [vmem:[#allocation2 + $0x60] sm:$0xff] 0.0
      %54 = vst [vmem:[#allocation2 + $0x68] sm:$0xff] 0.0
      %55 = vst [vmem:[#allocation2 + $0x70] sm:$0xff] 0.0
      %56 = vst [vmem:[#allocation2 + $0x78] sm:$0xff] 0.0
      %57 = vst [vmem:[#allocation2 + $0x80] sm:$0xff] 0.0
      %58 = vst [vmem:[#allocation2 + $0x88] sm:$0xff] 0.0
      %59 = vst [vmem:[#allocation2 + $0x90] sm:$0xff] 0.0
      %60 = vst [vmem:[#allocation2 + $0x98] sm:$0xff] 0.0
      %61 = vst [vmem:[#allocation2 + $0xa0] sm:$0xff] 0.0
      %62 = vst [vmem:[#allocation2 + $0xa8] sm:$0xff] 0.0
      %63 = vst [vmem:[#allocation2 + $0xb0] sm:$0xff] 0.0
      %64 = vst [vmem:[#allocation2 + $0xb8] sm:$0xff] 0.0
      %65 = vst [vmem:[#allocation2 + $0xc0] sm:$0xff] 0.0
      %66 = vst [vmem:[#allocation2 + $0xc8] sm:$0xff] 0.0
      %67 = vst [vmem:[#allocation2 + $0xd0] sm:$0xff] 0.0
      %68 = vst [vmem:[#allocation2 + $0xd8] sm:$0xff] 0.0
      %69 = vst [vmem:[#allocation2 + $0xe0] sm:$0xff] 0.0
      %70 = vst [vmem:[#allocation2 + $0xe8] sm:$0xff] 0.0
      %71 = vst [vmem:[#allocation2 + $0xf0] sm:$0xff] 0.0
      %72 = vst [vmem:[#allocation2 + $0xf8] sm:$0xff] 0.0
    $region29: #{tpu_custom_call.1} parent=1 // pred_fallthru
      _
    %v73 = vld [vmem:[#allocation2] sm:$0xff]
    %v74 = vld [vmem:[#allocation2 + $0x8] sm:$0xff]
    %v75 = vld [vmem:[#allocation2 + $0x10] sm:$0xff]
    %v76 = vld [vmem:[#allocation2 + $0x18] sm:$0xff]
    %v77 = vld [vmem:[#allocation2 + $0x20] sm:$0xff]
    %v78 = vld [vmem:[#allocation2 + $0x28] sm:$0xff]
    %v79 = vld [vmem:[#allocation2 + $0x30] sm:$0xff]
    %v80 = vld [vmem:[#allocation2 + $0x38] sm:$0xff]
    %v81 = vld [vmem:[#allocation2 + $0x40] sm:$0xff]
    %v82 = vld [vmem:[#allocation2 + $0x48] sm:$0xff]
    %v83 = vld [vmem:[#allocation2 + $0x50] sm:$0xff]
    %v84 = vld [vmem:[#allocation2 + $0x58] sm:$0xff]
    %v85 = vld [vmem:[#allocation2 + $0x60] sm:$0xff]
    %v86 = vld [vmem:[#allocation2 + $0x68] sm:$0xff]
    %v87 = vld [vmem:[#allocation2 + $0x70] sm:$0xff]
    %v88 = vld [vmem:[#allocation2 + $0x78] sm:$0xff]
    %v89 = vld [vmem:[#allocation2 + $0x80] sm:$0xff]
    %v90 = vld [vmem:[#allocation2 + $0x88] sm:$0xff]
    %v91 = vld [vmem:[#allocation2 + $0x90] sm:$0xff]
    %v92 = vld [vmem:[#allocation2 + $0x98] sm:$0xff]
    %v93 = vld [vmem:[#allocation2 + $0xa0] sm:$0xff]
    %v94 = vld [vmem:[#allocation2 + $0xa8] sm:$0xff]
    %v95 = vld [vmem:[#allocation2 + $0xb0] sm:$0xff]
    %v96 = vld [vmem:[#allocation2 + $0xb8] sm:$0xff]
    %v97 = vld [vmem:[#allocation2 + $0xc0] sm:$0xff]
    %v98 = vld [vmem:[#allocation2 + $0xc8] sm:$0xff]
    %v99 = vld [vmem:[#allocation2 + $0xd0] sm:$0xff]
    %v100 = vld [vmem:[#allocation2 + $0xd8] sm:$0xff]
    %v101 = vld [vmem:[#allocation2 + $0xe0] sm:$0xff]
    %v102 = vld [vmem:[#allocation2 + $0xe8] sm:$0xff]
    %v103 = vld [vmem:[#allocation2 + $0xf0] sm:$0xff]
    %v104 = vld [vmem:[#allocation2 + $0xf8] sm:$0xff]
    %v105 = vld [vmem:[#allocation3] sm:$0xff]
    %v106 = vld [vmem:[#allocation3 + $0x10] sm:$0xff]
    %v107 = vld [vmem:[#allocation3 + $0x20] sm:$0xff]
    %v108 = vld [vmem:[#allocation3 + $0x30] sm:$0xff]
    %v109 = vld [vmem:[#allocation3 + $0x40] sm:$0xff]
    %v110 = vld [vmem:[#allocation3 + $0x50] sm:$0xff]
    %v111 = vld [vmem:[#allocation3 + $0x60] sm:$0xff]
    %v112 = vld [vmem:[#allocation3 + $0x70] sm:$0xff]
    %v113 = vld [vmem:[#allocation3 + $0x80] sm:$0xff]
    %v114 = vld [vmem:[#allocation3 + $0x90] sm:$0xff]
    %v115 = vld [vmem:[#allocation3 + $0xa0] sm:$0xff]
    %v116 = vld [vmem:[#allocation3 + $0xb0] sm:$0xff]
    %v117 = vld [vmem:[#allocation3 + $0xc0] sm:$0xff]
    %v118 = vld [vmem:[#allocation3 + $0xd0] sm:$0xff]
    %v119 = vld [vmem:[#allocation3 + $0xe0] sm:$0xff]
    %v120 = vld [vmem:[#allocation3 + $0xf0] sm:$0xff]
    %v121 = vld [vmem:[#allocation3 + $0x100] sm:$0xff]
    %v122 = vld [vmem:[#allocation3 + $0x110] sm:$0xff]
    %v123 = vld [vmem:[#allocation3 + $0x120] sm:$0xff]
    %v124 = vld [vmem:[#allocation3 + $0x130] sm:$0xff]
    %v125 = vld [vmem:[#allocation3 + $0x140] sm:$0xff]
    %v126 = vld [vmem:[#allocation3 + $0x150] sm:$0xff]
    %v127 = vld [vmem:[#allocation3 + $0x160] sm:$0xff]
    %v128 = vld [vmem:[#allocation3 + $0x170] sm:$0xff]
    %v129 = vld [vmem:[#allocation3 + $0x180] sm:$0xff]
    %v130 = vld [vmem:[#allocation3 + $0x190] sm:$0xff]
    %v131 = vld [vmem:[#allocation3 + $0x1a0] sm:$0xff]
    %v132 = vld [vmem:[#allocation3 + $0x1b0] sm:$0xff]
    %v133 = vld [vmem:[#allocation3 + $0x1c0] sm:$0xff]
    %v134 = vld [vmem:[#allocation3 + $0x1d0] sm:$0xff]
    %v135 = vld [vmem:[#allocation3 + $0x1e0] sm:$0xff]
    %v136 = vld [vmem:[#allocation3 + $0x1f0] sm:$0xff]
    %v137 = vadd.f32 %v73, %v105
    %v138 = vadd.f32 %v74, %v106
    %v139 = vadd.f32 %v75, %v107
    %v140 = vadd.f32 %v76, %v108
    %v141 = vadd.f32 %v77, %v109
    %v142 = vadd.f32 %v78, %v110
    %v143 = vadd.f32 %v79, %v111
    %v144 = vadd.f32 %v80, %v112
    %v145 = vadd.f32 %v81, %v113
    %v146 = vadd.f32 %v82, %v114
    %v147 = vadd.f32 %v83, %v115
    %v148 = vadd.f32 %v84, %v116
    %v149 = vadd.f32 %v85, %v117
    %v150 = vadd.f32 %v86, %v118
    %v151 = vadd.f32 %v87, %v119
    %v152 = vadd.f32 %v88, %v120
    %v153 = vadd.f32 %v89, %v121
    %v154 = vadd.f32 %v90, %v122
    %v155 = vadd.f32 %v91, %v123
    %v156 = vadd.f32 %v92, %v124
    %v157 = vadd.f32 %v93, %v125
    %v158 = vadd.f32 %v94, %v126
    %v159 = vadd.f32 %v95, %v127
    %v160 = vadd.f32 %v96, %v128
    %v161 = vadd.f32 %v97, %v129
    %v162 = vadd.f32 %v98, %v130
    %v163 = vadd.f32 %v99, %v131
    %v164 = vadd.f32 %v100, %v132
    %v165 = vadd.f32 %v101, %v133
    %v166 = vadd.f32 %v102, %v134
    %v167 = vadd.f32 %v103, %v135
    %v168 = vadd.f32 %v104, %v136
    %v169 = vld [vmem:[#allocation3 + $0x8] sm:$0xff]
    %v170 = vld [vmem:[#allocation3 + $0x18] sm:$0xff]
    %v171 = vld [vmem:[#allocation3 + $0x28] sm:$0xff]
    %v172 = vld [vmem:[#allocation3 + $0x38] sm:$0xff]
    %v173 = vld [vmem:[#allocation3 + $0x48] sm:$0xff]
    %v174 = vld [vmem:[#allocation3 + $0x58] sm:$0xff]
    %v175 = vld [vmem:[#allocation3 + $0x68] sm:$0xff]
    %v176 = vld [vmem:[#allocation3 + $0x78] sm:$0xff]
    %v177 = vld [vmem:[#allocation3 + $0x88] sm:$0xff]
    %v178 = vld [vmem:[#allocation3 + $0x98] sm:$0xff]
    %v179 = vld [vmem:[#allocation3 + $0xa8] sm:$0xff]
    %v180 = vld [vmem:[#allocation3 + $0xb8] sm:$0xff]
    %v181 = vld [vmem:[#allocation3 + $0xc8] sm:$0xff]
    %v182 = vld [vmem:[#allocation3 + $0xd8] sm:$0xff]
    %v183 = vld [vmem:[#allocation3 + $0xe8] sm:$0xff]
    %v184 = vld [vmem:[#allocation3 + $0xf8] sm:$0xff]
    %v185 = vld [vmem:[#allocation3 + $0x108] sm:$0xff]
    %v186 = vld [vmem:[#allocation3 + $0x118] sm:$0xff]
    %v187 = vld [vmem:[#allocation3 + $0x128] sm:$0xff]
    %v188 = vld [vmem:[#allocation3 + $0x138] sm:$0xff]
    %v189 = vld [vmem:[#allocation3 + $0x148] sm:$0xff]
    %v190 = vld [vmem:[#allocation3 + $0x158] sm:$0xff]
    %v191 = vld [vmem:[#allocation3 + $0x168] sm:$0xff]
    %v192 = vld [vmem:[#allocation3 + $0x178] sm:$0xff]
    %v193 = vld [vmem:[#allocation3 + $0x188] sm:$0xff]
    %v194 = vld [vmem:[#allocation3 + $0x198] sm:$0xff]
    %v195 = vld [vmem:[#allocation3 + $0x1a8] sm:$0xff]
    %v196 = vld [vmem:[#allocation3 + $0x1b8] sm:$0xff]
    %v197 = vld [vmem:[#allocation3 + $0x1c8] sm:$0xff]
    %v198 = vld [vmem:[#allocation3 + $0x1d8] sm:$0xff]
    %v199 = vld [vmem:[#allocation3 + $0x1e8] sm:$0xff]
    %v200 = vld [vmem:[#allocation3 + $0x1f8] sm:$0xff]
    %v201 = vadd.f32 %v137, %v169
    %v202 = vadd.f32 %v138, %v170
    %v203 = vadd.f32 %v139, %v171
    %v204 = vadd.f32 %v140, %v172
    %v205 = vadd.f32 %v141, %v173
    %v206 = vadd.f32 %v142, %v174
    %v207 = vadd.f32 %v143, %v175
    %v208 = vadd.f32 %v144, %v176
    %v209 = vadd.f32 %v145, %v177
    %v210 = vadd.f32 %v146, %v178
    %v211 = vadd.f32 %v147, %v179
    %v212 = vadd.f32 %v148, %v180
    %v213 = vadd.f32 %v149, %v181
    %v214 = vadd.f32 %v150, %v182
    %v215 = vadd.f32 %v151, %v183
    %v216 = vadd.f32 %v152, %v184
    %v217 = vadd.f32 %v153, %v185
    %v218 = vadd.f32 %v154, %v186
    %v219 = vadd.f32 %v155, %v187
    %v220 = vadd.f32 %v156, %v188
    %v221 = vadd.f32 %v157, %v189
    %v222 = vadd.f32 %v158, %v190
    %v223 = vadd.f32 %v159, %v191
    %v224 = vadd.f32 %v160, %v192
    %v225 = vadd.f32 %v161, %v193
    %v226 = vadd.f32 %v162, %v194
    %v227 = vadd.f32 %v163, %v195
    %v228 = vadd.f32 %v164, %v196
    %v229 = vadd.f32 %v165, %v197
    %v230 = vadd.f32 %v166, %v198
    %v231 = vadd.f32 %v167, %v199
    %v232 = vadd.f32 %v168, %v200
    %233 = vst [vmem:[#allocation2] sm:$0xff] %v201
    %234 = vst [vmem:[#allocation2 + $0x8] sm:$0xff] %v202
    %235 = vst [vmem:[#allocation2 + $0x10] sm:$0xff] %v203
    %236 = vst [vmem:[#allocation2 + $0x18] sm:$0xff] %v204
    %237 = vst [vmem:[#allocation2 + $0x20] sm:$0xff] %v205
    %238 = vst [vmem:[#allocation2 + $0x28] sm:$0xff] %v206
    %239 = vst [vmem:[#allocation2 + $0x30] sm:$0xff] %v207
    %240 = vst [vmem:[#allocation2 + $0x38] sm:$0xff] %v208
    %241 = vst [vmem:[#allocation2 + $0x40] sm:$0xff] %v209
    %242 = vst [vmem:[#allocation2 + $0x48] sm:$0xff] %v210
    %243 = vst [vmem:[#allocation2 + $0x50] sm:$0xff] %v211
    %244 = vst [vmem:[#allocation2 + $0x58] sm:$0xff] %v212
    %245 = vst [vmem:[#allocation2 + $0x60] sm:$0xff] %v213
    %246 = vst [vmem:[#allocation2 + $0x68] sm:$0xff] %v214
    %247 = vst [vmem:[#allocation2 + $0x70] sm:$0xff] %v215
    %248 = vst [vmem:[#allocation2 + $0x78] sm:$0xff] %v216
    %249 = vst [vmem:[#allocation2 + $0x80] sm:$0xff] %v217
    %250 = vst [vmem:[#allocation2 + $0x88] sm:$0xff] %v218
    %251 = vst [vmem:[#allocation2 + $0x90] sm:$0xff] %v219
    %252 = vst [vmem:[#allocation2 + $0x98] sm:$0xff] %v220
    %253 = vst [vmem:[#allocation2 + $0xa0] sm:$0xff] %v221
    %254 = vst [vmem:[#allocation2 + $0xa8] sm:$0xff] %v222
    %255 = vst [vmem:[#allocation2 + $0xb0] sm:$0xff] %v223
    %256 = vst [vmem:[#allocation2 + $0xb8] sm:$0xff] %v224
    %257 = vst [vmem:[#allocation2 + $0xc0] sm:$0xff] %v225
    %258 = vst [vmem:[#allocation2 + $0xc8] sm:$0xff] %v226
    %259 = vst [vmem:[#allocation2 + $0xd0] sm:$0xff] %v227
    %260 = vst [vmem:[#allocation2 + $0xd8] sm:$0xff] %v228
    %261 = vst [vmem:[#allocation2 + $0xe0] sm:$0xff] %v229
    %262 = vst [vmem:[#allocation2 + $0xe8] sm:$0xff] %v230
    %263 = vst [vmem:[#allocation2 + $0xf0] sm:$0xff] %v231
    %264 = vst [vmem:[#allocation2 + $0xf8] sm:$0xff] %v232
    // Predicated region
    $region30: #{tpu_custom_call.1} parent=1 // pred_check
      %p265 = pneg %p37
    $region31: #{tpu_custom_call.1} parent=1 // pred_check_branch
      %267 = sbr.rel (%p265) target = $region33
    $region32: #{tpu_custom_call.1} parent=1 // pred_region
      %v268 = vld [vmem:[#allocation2] sm:$0xff]
      %v269 = vld [vmem:[#allocation2 + $0x8] sm:$0xff]
      %v270 = vld [vmem:[#allocation2 + $0x10] sm:$0xff]
      %v271 = vld [vmem:[#allocation2 + $0x18] sm:$0xff]
      %v272 = vld [vmem:[#allocation2 + $0x20] sm:$0xff]
      %v273 = vld [vmem:[#allocation2 + $0x28] sm:$0xff]
      %v274 = vld [vmem:[#allocation2 + $0x30] sm:$0xff]
      %v275 = vld [vmem:[#allocation2 + $0x38] sm:$0xff]
      %v276 = vld [vmem:[#allocation2 + $0x40] sm:$0xff]
      %v277 = vld [vmem:[#allocation2 + $0x48] sm:$0xff]
      %v278 = vld [vmem:[#allocation2 + $0x50] sm:$0xff]
      %v279 = vld [vmem:[#allocation2 + $0x58] sm:$0xff]
      %v280 = vld [vmem:[#allocation2 + $0x60] sm:$0xff]
      %v281 = vld [vmem:[#allocation2 + $0x68] sm:$0xff]
      %v282 = vld [vmem:[#allocation2 + $0x70] sm:$0xff]
      %v283 = vld [vmem:[#allocation2 + $0x78] sm:$0xff]
      %v284 = vld [vmem:[#allocation2 + $0x80] sm:$0xff]
      %v285 = vld [vmem:[#allocation2 + $0x88] sm:$0xff]
      %v286 = vld [vmem:[#allocation2 + $0x90] sm:$0xff]
      %v287 = vld [vmem:[#allocation2 + $0x98] sm:$0xff]
      %v288 = vld [vmem:[#allocation2 + $0xa0] sm:$0xff]
      %v289 = vld [vmem:[#allocation2 + $0xa8] sm:$0xff]
      %v290 = vld [vmem:[#allocation2 + $0xb0] sm:$0xff]
      %v291 = vld [vmem:[#allocation2 + $0xb8] sm:$0xff]
      %v292 = vld [vmem:[#allocation2 + $0xc0] sm:$0xff]
      %v293 = vld [vmem:[#allocation2 + $0xc8] sm:$0xff]
      %v294 = vld [vmem:[#allocation2 + $0xd0] sm:$0xff]
      %v295 = vld [vmem:[#allocation2 + $0xd8] sm:$0xff]
      %v296 = vld [vmem:[#allocation2 + $0xe0] sm:$0xff]
      %v297 = vld [vmem:[#allocation2 + $0xe8] sm:$0xff]
      %v298 = vld [vmem:[#allocation2 + $0xf0] sm:$0xff]
      %v299 = vld [vmem:[#allocation2 + $0xf8] sm:$0xff]
      %300 = vadd.xlane.f32.xlu0 %v268
      %v301 = vpop.xlane.xlu0 %300
      %302 = vadd.xlane.f32.xlu0 %v269
      %v303 = vpop.xlane.xlu0 %302
      %304 = vadd.xlane.f32.xlu0 %v270
      %v305 = vpop.xlane.xlu0 %304
      %306 = vadd.xlane.f32.xlu0 %v271
      %v307 = vpop.xlane.xlu0 %306
      %308 = vadd.xlane.f32.xlu0 %v272
      %v309 = vpop.xlane.xlu0 %308
      %310 = vadd.xlane.f32.xlu0 %v273
      %v311 = vpop.xlane.xlu0 %310
      %312 = vadd.xlane.f32.xlu0 %v274
      %v313 = vpop.xlane.xlu0 %312
      %314 = vadd.xlane.f32.xlu0 %v275
      %v315 = vpop.xlane.xlu0 %314
      %316 = vadd.xlane.f32.xlu0 %v276
      %v317 = vpop.xlane.xlu0 %316
      %318 = vadd.xlane.f32.xlu0 %v277
      %v319 = vpop.xlane.xlu0 %318
      %320 = vadd.xlane.f32.xlu0 %v278
      %v321 = vpop.xlane.xlu0 %320
      %322 = vadd.xlane.f32.xlu0 %v279
      %v323 = vpop.xlane.xlu0 %322
      %324 = vadd.xlane.f32.xlu0 %v280
      %v325 = vpop.xlane.xlu0 %324
      %326 = vadd.xlane.f32.xlu0 %v281
      %v327 = vpop.xlane.xlu0 %326
      %328 = vadd.xlane.f32.xlu0 %v282
      %v329 = vpop.xlane.xlu0 %328
      %330 = vadd.xlane.f32.xlu0 %v283
      %v331 = vpop.xlane.xlu0 %330
      %332 = vadd.xlane.f32.xlu0 %v284
      %v333 = vpop.xlane.xlu0 %332
      %334 = vadd.xlane.f32.xlu0 %v285
      %v335 = vpop.xlane.xlu0 %334
      %336 = vadd.xlane.f32.xlu0 %v286
      %v337 = vpop.xlane.xlu0 %336
      %338 = vadd.xlane.f32.xlu0 %v287
      %v339 = vpop.xlane.xlu0 %338
      %340 = vadd.xlane.f32.xlu0 %v288
      %v341 = vpop.xlane.xlu0 %340
      %342 = vadd.xlane.f32.xlu0 %v289
      %v343 = vpop.xlane.xlu0 %342
      %344 = vadd.xlane.f32.xlu0 %v290
      %v345 = vpop.xlane.xlu0 %344
      %346 = vadd.xlane.f32.xlu0 %v291
      %v347 = vpop.xlane.xlu0 %346
      %348 = vadd.xlane.f32.xlu0 %v292
      %v349 = vpop.xlane.xlu0 %348
      %350 = vadd.xlane.f32.xlu0 %v293
      %v351 = vpop.xlane.xlu0 %350
      %352 = vadd.xlane.f32.xlu0 %v294
      %v353 = vpop.xlane.xlu0 %352
      %354 = vadd.xlane.f32.xlu0 %v295
      %v355 = vpop.xlane.xlu0 %354
      %356 = vadd.xlane.f32.xlu0 %v296
      %v357 = vpop.xlane.xlu0 %356
      %358 = vadd.xlane.f32.xlu0 %v297
      %v359 = vpop.xlane.xlu0 %358
      %360 = vadd.xlane.f32.xlu0 %v298
      %v361 = vpop.xlane.xlu0 %360
      %362 = vadd.xlane.f32.xlu0 %v299
      %v363 = vpop.xlane.xlu0 %362
      %v364 = vld [vmem:[%s1] sm:$0xff]
      %v365 = vld [vmem:[%s1 + $0x8] sm:$0xff]
      %v366 = vld [vmem:[%s1 + $0x10] sm:$0xff]
      %v367 = vld [vmem:[%s1 + $0x18] sm:$0xff]
      %v368 = vld [vmem:[%s2] sm:$0x1]
      %v370 = vperm.slane %v368, 0
      %v404 = vlaneseq
      %v405 = vand.u32 %v404, 127
      %v406 = vperm.slane %v301, %v405
      %v407 = vadd.s32 %v405, 4294967288
      %v408 = vperm.slane %v303, %v407
      %vm409 = vcmask 130112
      %v410 = vsel %vm409, %v408, %v406
      %v411 = vadd.s32 %v405, 4294967280
      %v412 = vperm.slane %v305, %v411
      %vm413 = vcmask 195712
      %v414 = vsel %vm413, %v412, %v410
      %v415 = vadd.s32 %v405, 4294967272
      %v416 = vperm.slane %v307, %v415
      %vm417 = vcmask 261312
      %v418 = vsel %vm417, %v416, %v414
      %v419 = vperm.slane %v309, %v405
      %v420 = vperm.slane %v311, %v407
      %v421 = vsel %vm409, %v420, %v419
      %v422 = vperm.slane %v313, %v411
      %v423 = vsel %vm413, %v422, %v421
      %v424 = vperm.slane %v315, %v415
      %v425 = vsel %vm417, %v424, %v423
      %v426 = vperm.slane %v317, %v405
      %v427 = vperm.slane %v319, %v407
      %v428 = vsel %vm409, %v427, %v426
      %v429 = vperm.slane %v321, %v411
      %v430 = vsel %vm413, %v429, %v428
      %v431 = vperm.slane %v323, %v415
      %v432 = vsel %vm417, %v431, %v430
      %v433 = vperm.slane %v325, %v405
      %v434 = vperm.slane %v327, %v407
      %v435 = vsel %vm409, %v434, %v433
      %v436 = vperm.slane %v329, %v411
      %v437 = vsel %vm413, %v436, %v435
      %v438 = vperm.slane %v331, %v415
      %v439 = vsel %vm417, %v438, %v437
      %v440 = vperm.slane %v333, %v405
      %v441 = vperm.slane %v335, %v407
      %v442 = vsel %vm409, %v441, %v440
      %v443 = vperm.slane %v337, %v411
      %v444 = vsel %vm413, %v443, %v442
      %v445 = vperm.slane %v339, %v415
      %v446 = vsel %vm417, %v445, %v444
      %v447 = vperm.slane %v341, %v405
      %v448 = vperm.slane %v343, %v407
      %v449 = vsel %vm409, %v448, %v447
      %v450 = vperm.slane %v345, %v411
      %v451 = vsel %vm413, %v450, %v449
      %v452 = vperm.slane %v347, %v415
      %v453 = vsel %vm417, %v452, %v451
      %v454 = vperm.slane %v349, %v405
      %v455 = vperm.slane %v351, %v407
      %v456 = vsel %vm409, %v455, %v454
      %v457 = vperm.slane %v353, %v411
      %v458 = vsel %vm413, %v457, %v456
      %v459 = vperm.slane %v355, %v415
      %v460 = vsel %vm417, %v459, %v458
      %v461 = vperm.slane %v357, %v405
      %v462 = vperm.slane %v359, %v407
      %v463 = vsel %vm409, %v462, %v461
      %v464 = vperm.slane %v361, %v411
      %v465 = vsel %vm413, %v464, %v463
      %v466 = vperm.slane %v363, %v415
      %v467 = vsel %vm417, %v466, %v465
      %vm468 = vcmask 1041409
      %v469 = vsel %vm468, %v425, %v418
      %vm470 = vcmask 1042434
      %v471 = vsel %vm470, %v432, %v469
      %vm472 = vcmask 1043459
      %v473 = vsel %vm472, %v439, %v471
      %vm474 = vcmask 1044484
      %v475 = vsel %vm474, %v446, %v473
      %vm476 = vcmask 1045509
      %v477 = vsel %vm476, %v453, %v475
      %vm478 = vcmask 1046534
      %v479 = vsel %vm478, %v460, %v477
      %vm480 = vcmask 1047559
      %v481 = vsel %vm480, %v467, %v479
      %vm482 = vcmask 261120
      %v483 = vsel %vm482, %v481, 0
      %485 = vmatpush.msra.mxu0 0.0
      %486 = vmatpush.msra.mxu0 0.0
      %487 = vmatpush.msra.mxu0 0.0
      %488 = vmatpush.msra.mxu0 0.0
      %489 = vmatpush.msra.mxu0 0.0
      %490 = vmatpush.msra.mxu0 0.0
      %491 = vmatpush.msra.mxu0 0.0
      %492 = vmatpush.msra.mxu0 0.0
      %493 = vmatpush.msra.mxu0 0.0
      %494 = vmatpush.msra.mxu0 0.0
      %495 = vmatpush.msra.mxu0 0.0
      %496 = vmatpush.msra.mxu0 0.0
      %497 = vmatpush.msra.mxu0 %v367
      %498 = vmatpush.msra.mxu0 %v366
      %499 = vmatpush.msra.mxu0 %v365
      %500 = vmatpush.msra.mxu0 %v364
      %501 = vmatmul.f32.gmra.mxu0 %v483
      %v502 = vpop.f32.mrf.mxu0
      %v503 = vadd.f32 %v370, %v502
      %504 = vdwg.mxu0
      %v505 = vmax.f32 %v503, 0.0
      %v506 = vld [vmem:[%s3] sm:$0x3]
      %v507 = vld [vmem:[%s4] sm:$0x1]
      %v509 = vperm.slane %v507, 0
      %vm511 = vcmask 15360
      %v513 = vsel %vm511, %v505, 0
      %vm515 = vcmask 1041408
      %v517 = vsel %vm515, %v506, 0
      %519 = vmatpush.msra.mxu0 0.0
      %520 = vmatpush.msra.mxu0 0.0
      %521 = vmatpush.msra.mxu0 0.0
      %522 = vmatpush.msra.mxu0 0.0
      %523 = vmatpush.msra.mxu0 0.0
      %524 = vmatpush.msra.mxu0 0.0
      %525 = vmatpush.msra.mxu0 0.0
      %526 = vmatpush.msra.mxu0 0.0
      %527 = vmatpush.msra.mxu0 0.0
      %528 = vmatpush.msra.mxu0 0.0
      %529 = vmatpush.msra.mxu0 0.0
      %530 = vmatpush.msra.mxu0 0.0
      %531 = vmatpush.msra.mxu0 0.0
      %532 = vmatpush.msra.mxu0 0.0
      %533 = vmatpush.msra.mxu0 0.0
      %534 = vmatpush.msra.mxu0 %v517
      %535 = vmatmul.f32.gmra.mxu0 %v513
      %v536 = vpop.f32.mrf.mxu0
      %v537 = vadd.f32 %v509, %v536
      %538 = vdwg.mxu0
      %v539 = vxor.u32 %v537, 2147483648
      %v540 = vmul.f32 %v539, 1.442695
      %v541 = vpow.pop %v540
      %v542 = vadd.f32 %v541, 1.0
      %v543 = vrcp.pop %v542
      %v544 = vmul.f32 %v542, %v543
      %v545 = vsub.f32 1.0, %v544
      %v546 = vmul.f32 %v543, %v545
      %v547 = vadd.f32 %v543, %v546
      %vm548 = vweird.f32 %v542
      %vm549 = vweird.f32 %v543
      %vm550 = vmor %vm548, %vm549
      %v551 = vsel %vm550, %v543, %v547
      %v552 = vand.u32 2147483647, %v542
      %vm553 = vcmp.eq.f32.partialorder %v552, 8.507059e+37
      %v554 = vand.u32 %v542, 2147483648
      %v555 = vor.u32 1.1754944e-38, %v554
      %v556 = vsel %vm553, %v555, %v551
      %v557 = vmul.f32 1.0, %v556
      %558 = vst.msk [vmem:[#allocation6] sm:$0xff] %vm482, %v557
    $region33: #{tpu_custom_call.1} parent=1 // pred_fallthru
      _
    // Predicated region
    $region34: #{tpu_custom_call.1} parent=1 // pred_check
      _
    $region35: #{tpu_custom_call.1} parent=1 // pred_check_branch
      %560 = sbr.rel (0) target = $region37
    $region36: #{tpu_custom_call.1} parent=1 // pred_region
      %562 = vsyncadd [#allocation5], 0
      %s564 = sshll.u32 [#allocation6], 4
      %s565 = int_to_ptr.vmem [resolvable:$true] %s564
      %s566 = sshll.u32 %s5, 4
      %s567 = int_to_ptr.hbm [resolvable:$true] %s566
      %569 = dma.vmem_to_hbm [thread:$0]  %s565, 128, %s567, [#allocation5]
    $region37: #{tpu_custom_call.1} parent=1 // pred_fallthru
      _
    // Predicated region
    $region38: #{tpu_custom_call.1} parent=1 // pred_check
      _
    $region39: #{tpu_custom_call.1} parent=1 // pred_check_branch
      %571 = sbr.rel (0) target = $region41
    $region40: #{tpu_custom_call.1} parent=1 // pred_region
      %573 = dma.done [#allocation5], 128
    $region41: #{tpu_custom_call.1} parent=1 // pred_fallthru
      _
    %574 = vsyncpa [#allocation4], 1
    %575 = vsyncpa [#allocation5], 1

</llo_original>
